<compile_context>
chip_gen: v5e
topology: v5e:2x2
jax: 0.10.0
libtpu: 0.0.40
codegen_flags: <defaults>
</compile_context>

<pallas_src>
import jax
import jax.numpy as jnp
from jax.experimental import pallas as pl
from jax.experimental.pallas import tpu as pltpu

TEMPERATURE = 1.0


def _mdbm_hook_kernel(x2_ref, w_ref, bm_ref, out_ref, acc_ref):
    """One (shard, F-tile) grid step of the MDBM intervention.

    x2_ref : (2*Bp, D)  stacked [source ; base] activations (weight dtype)
    w_ref  : (TF, 2*D)  stacked weights [W_enc^T | W_dec] for this F tile
    bm_ref : (2, TF)    row 0 = b_enc (f32), row 1 = mask values (f32)
    out_ref: (Bp, D)    per-shard partial SAE decode (f32)
    acc_ref: (Bp, D)    f32 VMEM accumulator, persists across the F-tile loop
    """
    k = pl.program_id(1)
    last_k = pl.num_programs(1) - 1   # evaluated at kernel top level only

    @pl.when(k == 0)
    def _init():
        acc_ref[...] = jnp.zeros_like(acc_ref)

    d = x2_ref.shape[1]
    bp = acc_ref.shape[0]

    w_enc_t = w_ref[:, :d]   # (TF, D) encoder rows (stored transposed)
    w_dec = w_ref[:, d:]     # (TF, D) decoder rows

    # Fused SAE encode of [source ; base]: one MXU pass, expressed as A . B^T
    # so the encoder weight tile stays a contiguous (TF, D) slab.
    acts_2BF = jax.lax.dot_general(
        x2_ref[...],
        w_enc_t,
        dimension_numbers=(((1,), (1,)), ((), ())),
        preferred_element_type=jnp.float32,
    )
    b_enc_F = bm_ref[0:1, :]          # (1, TF) f32
    m_F = bm_ref[1:2, :]              # (1, TF) f32
    acts_2BF = jnp.maximum(acts_2BF + b_enc_F, 0.0)

    src_act_BF = acts_2BF[:bp]        # sublane-aligned static split (Bp % 8 == 0)
    base_act_BF = acts_2BF[bp:]

    # (1 - m) * base + m * src  ==  base + m * (src - base)
    mod_act_BF = base_act_BF + m_F * (src_act_BF - base_act_BF)

    # Partial SAE decode for this F tile, accumulated in f32.
    acc_ref[...] += jnp.dot(
        mod_act_BF.astype(w_dec.dtype),
        w_dec,
        preferred_element_type=jnp.float32,
    )

    @pl.when(k == last_k)
    def _finalize():
        out_ref[...] = acc_ref[...].astype(out_ref.dtype)


def _pick_tile_f(f_shard: int, tile_f: int) -> int:
    """Largest F tile <= tile_f that divides f_shard (lane-aligned when possible)."""
    tf = min(tile_f, f_shard)
    if tf == f_shard:
        return tf
    tf = (tf // 128) * 128
    while tf >= 128 and f_shard % tf:
        tf -= 128
    return tf if tf >= 128 else f_shard


def _pick_vmem_limit(bytes_needed: int) -> int:
    """Generation-aware scoped-VMEM limit (never exceeds physical VMEM)."""
    try:
        cap = int(pltpu.get_tpu_info().vmem_capacity_bytes)
    except Exception:
        cap = 64 << 20  # conservative: v7x physical VMEM per TensorCore
    headroom = 16 << 20
    return int(min(cap - headroom, max(32 << 20, bytes_needed + headroom)))


def mdbm_intervention(
    resid_BLD,        # (B, L, D) residual stream at the intervened layer
    source_rep_BD,    # (B, D)    source representation
    base_pos_B,       # (B,)      int32 positions in the base sequence
    params,           # dict: W_enc, b_enc, W_dec, b_dec, binary_mask
    training_mode: bool = False,
    tile_f: int = 1024,              # F tile; raise to 2048+ on 128 MiB v5e/v6e
    num_shards: int = 1,             # set 2 only on dual-TensorCore v7x
    weight_dtype=jnp.bfloat16,       # stream weights as bf16 (f32 accumulation)
):
    B, L, D = resid_BLD.shape
    Fdim = params["W_enc"].shape[1]

    if L == 1:
        # The torch hook skips single-token (decode) steps untouched.
        return resid_BLD, None

    assert Fdim % num_shards == 0, "d_sae must divide evenly across shards"
    f_shard = Fdim // num_shards
    if num_shards > 1:
        assert f_shard % 128 == 0, "per-shard d_sae must be lane aligned"
    tf = _pick_tile_f(f_shard, tile_f)
    kt = f_shard // tf

    w_dtype = jnp.dtype(weight_dtype)
    itemsize = w_dtype.itemsize

    # --- JAX glue: gather resid_BLD[i, base_pos_B[i], :] (hook's fancy index)
    resid_BD = resid_BLD[jnp.arange(B), base_pos_B, :]

    # Stack source + base with each half padded to a sublane multiple so the
    # in-kernel split is a free, aligned static slice.
    Bp = ((B + 7) // 8) * 8
    x2 = jnp.zeros((2 * Bp, D), w_dtype)
    x2 = x2.at[:B, :].set(source_rep_BD.astype(w_dtype))
    x2 = x2.at[Bp:Bp + B, :].set(resid_BD.astype(w_dtype))

    # Stacked weight slab [W_enc^T | W_dec] -> one contiguous (TF, 2D) DMA per
    # grid step.  TODO(synk): in production precompute this slab once outside
    # the per-call jit instead of transposing/casting every invocation.
    w_stacked = jnp.concatenate(
        [params["W_enc"].T.astype(w_dtype), params["W_dec"].astype(w_dtype)],
        axis=1,
    )  # (F, 2D)

    # Mask computed ONCE in f32 (eval-mode thresholding stays exact) and
    # stacked with b_enc so both ride in a single tiny (2, TF) DMA per step.
    mask_logits = params["binary_mask"].astype(jnp.float32)
    if training_mode:
        mask_vals = jax.nn.sigmoid(mask_logits / TEMPERATURE)
    else:
        mask_vals = (mask_logits > 0.0).astype(jnp.float32)
    bm = jnp.stack([params["b_enc"].astype(jnp.float32), mask_vals], axis=0)

    # Double-buffered stacked weight tiles dominate the VMEM footprint.
    weight_tile_bytes = 2 * (tf * 2 * D) * itemsize
    vmem_limit = _pick_vmem_limit(weight_tile_bytes)

    cost = pl.CostEstimate(
        flops=2 * (2 * Bp) * D * Fdim + 2 * Bp * Fdim * D,
        transcendentals=0,
        bytes_accessed=(w_stacked.size * itemsize
                        + x2.size * itemsize
                        + bm.size * 4
                        + num_shards * Bp * D * 4),
    )

    partial_out = pl.pallas_call(
        _mdbm_hook_kernel,
        out_shape=jax.ShapeDtypeStruct((num_shards, Bp, D), jnp.float32),
        grid_spec=pltpu.PrefetchScalarGridSpec(
            num_scalar_prefetch=0,
            grid=(num_shards, kt),
            in_specs=[
                pl.BlockSpec((2 * Bp, D), lambda s, k: (0, 0)),            # x2
                pl.BlockSpec((tf, 2 * D), lambda s, k: (s * kt + k, 0)),   # weights
                pl.BlockSpec((2, tf), lambda s, k: (0, s * kt + k)),       # b_enc+mask
            ],
            out_specs=pl.BlockSpec((None, Bp, D), lambda s, k: (s, 0, 0)),
            scratch_shapes=[pltpu.VMEM((Bp, D), jnp.float32)],
        ),
        compiler_params=pltpu.CompilerParams(
            dimension_semantics=("parallel", "arbitrary"),
            vmem_limit_bytes=vmem_limit,
        ),
        cost_estimate=cost,
    )(x2, w_stacked, bm)

    # Tiny cross-shard reduce + decoder bias (fused by XLA; exact in f32).
    modified_resid_BD = (
        partial_out.sum(axis=0)[:B] + params["b_dec"].astype(jnp.float32)[None, :]
    ).astype(resid_BLD.dtype)

    # --- JAX glue: scatter the modified rows back.  resid_BLD is donated via
    # jit so XLA performs this in place (no full (B, L, D) HBM copy).
    resid_out_BLD = resid_BLD.at[jnp.arange(B), base_pos_B, :].set(
        modified_resid_BD
    )
    # TODO(synk): the remainder of MDBM.forward (running the pretrained LLM
    # with this hook, logits[:, -1, :], argmax, tokenizer.decode) has no
    # standalone Pallas equivalent without the model weights.
    # TODO(synk): a sparse two-phase encode/decode (DMA only active W_dec rows
    # via scalar prefetch) could cut decoder HBM traffic if activations are
    # k-sparse; needs profiling data first.
    return resid_out_BLD, modified_resid_BD


mdbm_intervention_jit = jax.jit(
    mdbm_intervention,
    static_argnames=("training_mode", "tile_f", "num_shards", "weight_dtype"),
    donate_argnums=(0,),
)


def make_params(key, d_in, d_sae):
    k1, k2, k3, k4, k5 = jax.random.split(key, 5)
    return {
        "W_enc": jax.random.normal(k1, (d_in, d_sae), jnp.float32) * 0.05,
        "b_enc": jax.random.normal(k2, (d_sae,), jnp.float32) * 0.01,
        "W_dec": jax.random.normal(k3, (d_sae, d_in), jnp.float32) * 0.05,
        "b_dec": jax.random.normal(k4, (d_in,), jnp.float32) * 0.01,
        # torch.zeros init in the module; small random logits so both the
        # training (sigmoid) and eval (threshold) paths are exercised.
        "binary_mask": jax.random.normal(k5, (d_sae,), jnp.float32) * 0.5,
    }


def _reference(resid_BLD, source_rep_BD, base_pos_B, params, training_mode):
    B = resid_BLD.shape[0]
    hp = jax.lax.Precision.HIGHEST
    W_enc = params["W_enc"].astype(jnp.float32)
    b_enc = params["b_enc"].astype(jnp.float32)
    W_dec = params["W_dec"].astype(jnp.float32)
    b_dec = params["b_dec"].astype(jnp.float32)
    mask = params["binary_mask"].astype(jnp.float32)

    resid_BD = resid_BLD[jnp.arange(B), base_pos_B, :].astype(jnp.float32)
    src = source_rep_BD.astype(jnp.float32)
    enc = lambda x: jnp.maximum(jnp.dot(x, W_enc, precision=hp) + b_enc, 0.0)
    src_act = enc(src)
    base_act = enc(resid_BD)
    if training_mode:
        m = jax.nn.sigmoid(mask / TEMPERATURE)
    else:
        m = (mask > 0.0).astype(jnp.float32)
    mod_act = (1.0 - m) * base_act + m * src_act
    mod_resid = jnp.dot(mod_act, W_dec, precision=hp) + b_dec
    return resid_BLD.at[jnp.arange(B), base_pos_B, :].set(
        mod_resid.astype(resid_BLD.dtype)
    )


if __name__ == "__main__":
    # batch, seq, d_model (sae d_in), d_sae.  B=4 exercises the Bp=8 padding.
    B, L, D, F = 4, 8, 128, 256

    key = jax.random.PRNGKey(0)
    k_resid, k_src, k_pos, k_params = jax.random.split(key, 4)

    resid_BLD = jax.random.normal(k_resid, (B, L, D), jnp.float32)
    source_rep_BD = jax.random.normal(k_src, (B, D), jnp.float32)
    base_pos_B = jax.random.randint(k_pos, (B,), 0, L, dtype=jnp.int32)
    params = make_params(k_params, D, F)

    configs = [
        # (training_mode, num_shards, weight_dtype, tolerance)
        (False, 1, jnp.float32, 1e-3),    # eval mask, 2 F-tiles accumulated
        (True, 2, jnp.float32, 1e-3),     # training mask, F split across shards
        (False, 2, jnp.bfloat16, 5e-2),   # bf16 weight streaming (prod default)
    ]

    ok = True
    for training_mode, num_shards, w_dtype, tol in configs:
        out_BLD, _ = mdbm_intervention_jit(
            jnp.copy(resid_BLD),          # copy: the arg is donated
            source_rep_BD,
            base_pos_B,
            params,
            training_mode=training_mode,
            tile_f=128,
            num_shards=num_shards,
            weight_dtype=w_dtype,
        )
        out_BLD = jax.block_until_ready(out_BLD)
        ref_BLD = _reference(resid_BLD, source_rep_BD, base_pos_B, params,
                             training_mode)
        ok = ok and bool(jnp.allclose(out_BLD, ref_BLD, atol=tol, rtol=tol))

    print("KERNEL_OK" if ok else "KERNEL_MISMATCH")
</pallas_src>

<mosaic_0001>
module attributes {stable_mosaic.version = 11 : i64} {
  func.func @_mdbm_hook_kernel(%arg0: i32, %arg1: i32, %arg2: memref<16x128xf32, #tpu.memory_space<vmem>>, %arg3: memref<128x256xf32, #tpu.memory_space<vmem>>, %arg4: memref<2x128xf32, #tpu.memory_space<vmem>>, %arg5: memref<1x8x128xf32, #tpu.memory_space<vmem>>, %arg6: memref<8x128xf32, #tpu.memory_space<vmem>>) attributes {dimension_semantics = [#tpu.dimension_semantics<parallel>, #tpu.dimension_semantics<arbitrary>], iteration_bounds = array<i64: 1, 2>, scalar_prefetch = 0 : i64, scratch_operands = 1 : i64, tpu.core_type = #tpu.core_type<tc>, window_params = [{pipeline_mode = #tpu.pipeline_mode<synchronous>, transform_indices = @transform_0, window_bounds = array<i64: 16, 128>}, {transform_indices = @transform_1, window_bounds = array<i64: 128, 256>}, {transform_indices = @transform_2, window_bounds = array<i64: 2, 128>}, {transform_indices = @transform_3, window_bounds = array<i64: 1, 8, 128>}]} {
    %c0_i32 = arith.constant 0 : i32
    %0 = arith.cmpi eq, %arg1, %c0_i32 : i32
    %1 = arith.extui %0 : i1 to i32
    %c0_i32_0 = arith.constant 0 : i32
    %2 = arith.cmpi ne, %1, %c0_i32_0 : i32
    scf.if %2 {
      %cst_15 = arith.constant 0.000000e+00 : f32
      %26 = vector.broadcast %cst_15 : f32 to vector<8x128xf32>
      %c0_16 = arith.constant 0 : index
      %c0_17 = arith.constant 0 : index
      %27 = vector.load %arg6[%c0_16, %c0_17] : memref<8x128xf32, #tpu.memory_space<vmem>>, vector<8x128xf32>
      tpu.vector_store %arg6[%c0_16, %c0_17], %26 {strides = array<i32>} : memref<8x128xf32, #tpu.memory_space<vmem>>, vector<8x128xf32>,
    } else {
    }
    %c0 = arith.constant 0 : index
    %c0_1 = arith.constant 0 : index
    %3 = vector.load %arg3[%c0, %c0_1] : memref<128x256xf32, #tpu.memory_space<vmem>>, vector<128x128xf32>
    %c0_2 = arith.constant 0 : index
    %c128 = arith.constant 128 : index
    %4 = vector.load %arg3[%c0_2, %c128] : memref<128x256xf32, #tpu.memory_space<vmem>>, vector<128x128xf32>
    %c0_3 = arith.constant 0 : index
    %c0_4 = arith.constant 0 : index
    %5 = vector.load %arg2[%c0_3, %c0_4] : memref<16x128xf32, #tpu.memory_space<vmem>>, vector<16x128xf32>
    %cst = arith.constant dense<0.000000e+00> : vector<16x128xf32>
    %6 = tpu.matmul %5, %3, %cst {dimension_numbers = #tpu.dot_dimension_numbers<[1], [1], [0], [0], [0, 0, 1, 0], [], []>} : vector<16x128xf32>, vector<128x128xf32>, vector<16x128xf32> -> vector<16x128xf32>
    %c0_5 = arith.constant 0 : index
    %c0_6 = arith.constant 0 : index
    %7 = vector.load %arg4[%c0_5, %c0_6] : memref<2x128xf32, #tpu.memory_space<vmem>>, vector<1x128xf32>
    %c1 = arith.constant 1 : index
    %c0_7 = arith.constant 0 : index
    %8 = vector.load %arg4[%c1, %c0_7] : memref<2x128xf32, #tpu.memory_space<vmem>>, vector<1x128xf32>
    %9 = vector.broadcast %7 : vector<1x128xf32> to vector<16x128xf32>
    %10 = arith.addf %6, %9 : vector<16x128xf32>
    %cst_8 = arith.constant 0.000000e+00 : f32
    %11 = vector.broadcast %cst_8 : f32 to vector<16x128xf32>
    %12 = arith.maximumf %10, %11 : vector<16x128xf32>
    %13 = vector.extract_strided_slice %12 {offsets = [0, 0], sizes = [8, 128], strides = [1, 1]} : vector<16x128xf32> to vector<8x128xf32>
    %14 = vector.extract_strided_slice %12 {offsets = [8, 0], sizes = [8, 128], strides = [1, 1]} : vector<16x128xf32> to vector<8x128xf32>
    %15 = arith.subf %13, %14 : vector<8x128xf32>
    %16 = vector.broadcast %8 : vector<1x128xf32> to vector<8x128xf32>
    %17 = arith.mulf %16, %15 : vector<8x128xf32>
    %18 = arith.addf %14, %17 : vector<8x128xf32>
    %c0_9 = arith.constant 0 : index
    %c0_10 = arith.constant 0 : index
    %19 = vector.load %arg6[%c0_9, %c0_10] : memref<8x128xf32, #tpu.memory_space<vmem>>, vector<8x128xf32>
    %cst_11 = arith.constant dense<0.000000e+00> : vector<8x128xf32>
    %20 = tpu.matmul %18, %4, %cst_11 {dimension_numbers = #tpu.dot_dimension_numbers<[1], [0], [0], [1], [0, 0, 1, 1], [], []>} : vector<8x128xf32>, vector<128x128xf32>, vector<8x128xf32> -> vector<8x128xf32>
    %21 = arith.addf %19, %20 : vector<8x128xf32>
    %c0_12 = arith.constant 0 : index
    %c0_13 = arith.constant 0 : index
    %22 = vector.load %arg6[%c0_12, %c0_13] : memref<8x128xf32, #tpu.memory_space<vmem>>, vector<8x128xf32>
    tpu.vector_store %arg6[%c0_12, %c0_13], %21 {strides = array<i32>} : memref<8x128xf32, #tpu.memory_space<vmem>>, vector<8x128xf32>,
    %c1_i32 = arith.constant 1 : i32
    %23 = arith.cmpi eq, %arg1, %c1_i32 : i32
    %24 = arith.extui %23 : i1 to i32
    %c0_i32_14 = arith.constant 0 : i32
    %25 = arith.cmpi ne, %24, %c0_i32_14 : i32
    scf.if %25 {
      %c0_15 = arith.constant 0 : index
      %c0_16 = arith.constant 0 : index
      %26 = vector.load %arg6[%c0_15, %c0_16] : memref<8x128xf32, #tpu.memory_space<vmem>>, vector<8x128xf32>
      %c0_17 = arith.constant 0 : index
      %c0_18 = arith.constant 0 : index
      %c0_19 = arith.constant 0 : index
      %27 = vector.load %arg5[%c0_17, %c0_18, %c0_19] : memref<1x8x128xf32, #tpu.memory_space<vmem>>, vector<1x8x128xf32>
      %28 = vector.shape_cast %27 : vector<1x8x128xf32> to vector<8x128xf32>
      %29 = vector.shape_cast %26 : vector<8x128xf32> to vector<1x8x128xf32>
      tpu.vector_store %arg5[%c0_17, %c0_18, %c0_19], %29 {strides = array<i32>} : memref<1x8x128xf32, #tpu.memory_space<vmem>>, vector<1x8x128xf32>,
    } else {
    }
    return
  }
  func.func @transform_0(%arg0: i32, %arg1: i32) -> (i32, i32) {
    %c0_i32 = arith.constant 0 : i32
    %c0_i32_0 = arith.constant 0 : i32
    %c0_i32_1 = arith.constant 0 : i32
    return %c0_i32, %c0_i32_0 : i32, i32
  }
  func.func @transform_1(%arg0: i32, %arg1: i32) -> (i32, i32) {
    %c2_i32 = arith.constant 2 : i32
    %0 = arith.muli %arg0, %c2_i32 : i32
    %1 = arith.addi %0, %arg1 : i32
    %c0_i32 = arith.constant 0 : i32
    %c0_i32_0 = arith.constant 0 : i32
    return %1, %c0_i32 : i32, i32
  }
  func.func @transform_2(%arg0: i32, %arg1: i32) -> (i32, i32) {
    %c2_i32 = arith.constant 2 : i32
    %0 = arith.muli %arg0, %c2_i32 : i32
    %1 = arith.addi %0, %arg1 : i32
    %c0_i32 = arith.constant 0 : i32
    %c0_i32_0 = arith.constant 0 : i32
    return %c0_i32, %1 : i32, i32
  }
  func.func @transform_3(%arg0: i32, %arg1: i32) -> (i32, i32, i32) {
    %c0_i32 = arith.constant 0 : i32
    %c0_i32_0 = arith.constant 0 : i32
    %c0_i32_1 = arith.constant 0 : i32
    return %arg0, %c0_i32, %c0_i32_0 : i32, i32, i32
  }
}

</mosaic_0001>

<llo_original>
// kernel: mdbm_intervention.1
$region0: #{mdbm_intervention.1}
  #allocation0 [shape = 'u32[]', space=smem, size = 0x4, offset = 0x4, fixed_abs, tag = 'smem constant byte address 0x4 - core index']
  #allocation1 [shape = 'u32[72,128]{1,0:T(1,128)}', space=vmem, size = 0x9000, scoped, tag = 'internal scratch']
  #allocation2 [shape = 'f32[8,128]{1,0:T(8,128)}', space=vmem, size = 0x1000, scoped, tag = 'scratch operand']
  %s0 = inlined_call_operand.vmem [shape: f32[16,128], index: 0, kind: input, shape index: {}]
  %s1 = inlined_call_operand.vmem [shape: f32[256,256], index: 1, kind: input, shape index: {}]
  %s2 = inlined_call_operand.vmem [shape: f32[2,256], index: 2, kind: input, shape index: {}]
  %s3 = inlined_call_operand.vmem [shape: f32[1,8,128], index: 3, kind: output, shape index: {}]
  %s4 = sld [smem:[#allocation0]]
  $region53: #{mdbm_intervention.1} parent=0
    _
  %s6 = ssub.s32 1, %s4
  %s7 = scalar_select 0, %s6, %s4
  loop: start=0, step=1, limit=4
  $region2: #{mdbm_intervention.1} parent=0 // loop_pre_header
    _
  $region3: #{mdbm_intervention.1} parent=0 // loop_header
    %s9 = sphi 0, %s13
    %p10 = scmp.ge.s32.totalorder %s9, 4
    %s16 = sphi 0, %s28
    %s17 = sphi 0, %s24
    %s18 = sphi 0, %s16
    %s19 = sphi 0, %s17
    %s20 = sphi 0, %s18
    %s21 = sphi 0, %s19
    %s29 = sphi 0, %s29
    %s31 = sphi 0, %s29
    %s32 = sphi 0, %s31
    %s46 = sphi 0, %s32
    %s56 = sphi 0, %s58
    %s59 = sphi 0, %s56
    %s60 = sphi 0, %s59
    %s76 = sphi 0, %s60
    %s86 = sphi 0, %s88
    %s89 = sphi 0, %s86
    %s90 = sphi 0, %s89
    %s106 = sphi 0, %s90
    %s112 = sphi 0, %s114
    %s115 = sphi 0, %s112
    %s116 = sphi 0, %s115
    %s132 = sphi 0, %s116
  $region4: #{mdbm_intervention.1} parent=0 // loop_header_branch
    %12 = sbr.rel (%p10) target = $region8
  $region5: #{mdbm_intervention.1} parent=0 // loop_body
    %s14 = ssub.s32 %s9, 1
    %s15 = ssub.s32 %s9, 2
    %s22 = sadd.s32 1, %s17
    %p23 = scmp.ge.s32.totalorder %s22, 2
    %s24 = scalar_select %p23, 0, %s22
    %s25 = sadd.s32 1, %s16
    %s26 = scalar_select %p23, %s25, %s16
    %p27 = scmp.ge.s32.totalorder %s26, 1
    %s28 = scalar_select %p27, 0, %s26
    %s30 = sadd.s32 %s29, 1
    %p33 = scmp.eq.s32.totalorder %s9, 1
    %p34 = scmp.ne.s32.totalorder %s29, %s31
    %p35 = scmp.eq.s32.totalorder %s9, 0
    %p36 = por %p34, %p35
    %p37 = scmp.ne.s32.totalorder %s29, %s31
    %p38 = scmp.eq.s32.totalorder %s14, 1
    %p39 = por %p37, %p38
    %p40 = scmp.ne.s32.totalorder %s31, %s32
    %p41 = scmp.eq.s32.totalorder %s14, 0
    %p42 = por %p40, %p41
    %p43 = scmp.ne.s32.totalorder %s31, %s32
    %p44 = scmp.eq.s32.totalorder %s15, 1
    %p45 = por %p43, %p44
    %p47 = scmp.ne.s32.totalorder %s32, %s46
    %p48 = scmp.eq.s32.totalorder %s15, 0
    %p49 = por %p47, %p48
    %s50 = smul.u32 %s16, 2
    %s51 = sadd.s32 %s50, %s17
    %s52 = smul.u32 %s28, 2
    %s53 = sadd.s32 %s52, %s24
    %s54 = ssub.s32 %s51, %s53
    %p55 = scmp.eq.s32.totalorder %s54, 0
    %s57 = sadd.s32 %s56, 1
    %s58 = scalar_select %p55, %s56, %s57
    %p61 = pneg %p55
    %p62 = scmp.eq.s32.totalorder %s9, 1
    %p63 = por %p61, %p62
    %p64 = scmp.ne.s32.totalorder %s56, %s59
    %p65 = scmp.eq.s32.totalorder %s9, 0
    %p66 = por %p64, %p65
    %p67 = scmp.ne.s32.totalorder %s56, %s59
    %p68 = scmp.eq.s32.totalorder %s14, 1
    %p69 = por %p67, %p68
    %p70 = scmp.ne.s32.totalorder %s59, %s60
    %p71 = scmp.eq.s32.totalorder %s14, 0
    %p72 = por %p70, %p71
    %p73 = scmp.ne.s32.totalorder %s59, %s60
    %p74 = scmp.eq.s32.totalorder %s15, 1
    %p75 = por %p73, %p74
    %p77 = scmp.ne.s32.totalorder %s60, %s76
    %p78 = scmp.eq.s32.totalorder %s15, 0
    %p79 = por %p77, %p78
    %s80 = smul.u32 %s16, 2
    %s81 = sadd.s32 %s80, %s17
    %s82 = smul.u32 %s28, 2
    %s83 = sadd.s32 %s82, %s24
    %s84 = ssub.s32 %s81, %s83
    %p85 = scmp.eq.s32.totalorder %s84, 0
    %s87 = sadd.s32 %s86, 1
    %s88 = scalar_select %p85, %s86, %s87
    %p91 = pneg %p85
    %p92 = scmp.eq.s32.totalorder %s9, 1
    %p93 = por %p91, %p92
    %p94 = scmp.ne.s32.totalorder %s86, %s89
    %p95 = scmp.eq.s32.totalorder %s9, 0
    %p96 = por %p94, %p95
    %p97 = scmp.ne.s32.totalorder %s86, %s89
    %p98 = scmp.eq.s32.totalorder %s14, 1
    %p99 = por %p97, %p98
    %p100 = scmp.ne.s32.totalorder %s89, %s90
    %p101 = scmp.eq.s32.totalorder %s14, 0
    %p102 = por %p100, %p101
    %p103 = scmp.ne.s32.totalorder %s89, %s90
    %p104 = scmp.eq.s32.totalorder %s15, 1
    %p105 = por %p103, %p104
    %p107 = scmp.ne.s32.totalorder %s90, %s106
    %p108 = scmp.eq.s32.totalorder %s15, 0
    %p109 = por %p107, %p108
    %s110 = ssub.s32 %s16, %s28
    %p111 = scmp.eq.s32.totalorder %s110, 0
    %s113 = sadd.s32 %s112, 1
    %s114 = scalar_select %p111, %s112, %s113
    %p117 = pneg %p111
    %p118 = scmp.eq.s32.totalorder %s9, 1
    %p119 = por %p117, %p118
    %p120 = scmp.ne.s32.totalorder %s112, %s115
    %p121 = scmp.eq.s32.totalorder %s9, 0
    %p122 = por %p120, %p121
    %p123 = scmp.ne.s32.totalorder %s112, %s115
    %p124 = scmp.eq.s32.totalorder %s14, 1
    %p125 = por %p123, %p124
    %p126 = scmp.ne.s32.totalorder %s115, %s116
    %p127 = scmp.eq.s32.totalorder %s14, 0
    %p128 = por %p126, %p127
    %p129 = scmp.ne.s32.totalorder %s115, %s116
    %p130 = scmp.eq.s32.totalorder %s15, 1
    %p131 = por %p129, %p130
    %p133 = scmp.ne.s32.totalorder %s116, %s132
    %p134 = scmp.eq.s32.totalorder %s15, 0
    %p135 = por %p133, %p134
    %p136 = scmp.le.s32.totalorder 1, %s9
    %p137 = scmp.lt.s32.totalorder %s9, 3
    %p138 = pnand %p136, %p137
    %p139 = pneg %p138
    // Predicated region
    $region9: #{mdbm_intervention.1} parent=5 // pred_check
      _
    $region10: #{mdbm_intervention.1} parent=5 // pred_check_branch
      %141 = sbr.rel (%p138) target = $region12
    $region11: #{mdbm_intervention.1} parent=5 // pred_region
      %s142 = ssub.s32 %s9, 1
      // Predicated region
      $region13: #{mdbm_intervention.1} parent=11 // pred_check
        %p143 = pneg %p42
      $region14: #{mdbm_intervention.1} parent=11 // pred_check_branch
        %145 = sbr.rel (%p143) target = $region16
      $region15: #{mdbm_intervention.1} parent=11 // pred_region
        _
      $region16: #{mdbm_intervention.1} parent=11 // pred_fallthru
        _
    $region12: #{mdbm_intervention.1} parent=5 // pred_fallthru
      _
    %p146 = scmp.lt.s32.totalorder %s9, 2
    // Predicated region
    $region17: #{mdbm_intervention.1} parent=5 // pred_check
      %p147 = pneg %p146
    $region18: #{mdbm_intervention.1} parent=5 // pred_check_branch
      %149 = sbr.rel (%p147) target = $region20
    $region19: #{mdbm_intervention.1} parent=5 // pred_region
      // Predicated region
      $region21: #{mdbm_intervention.1} parent=19 // pred_check
        %p150 = pneg %p66
      $region22: #{mdbm_intervention.1} parent=19 // pred_check_branch
        %152 = sbr.rel (%p150) target = $region24
      $region23: #{mdbm_intervention.1} parent=19 // pred_region
        %s153 = smul.u32 %s16, 2
        %s154 = sadd.s32 %s153, %s17
        %s155 = smul.u32 16, %s154
        %p156 = scmp.lt.s32.totalorder %s155, 31
        %s157 = scalar_select %p156, %s155, 31
        %s158 = smul.addr %s157, 2
        %s159 = smul.addr %s158, 8
        %s160 = scalar_lea.vmem %s1, %s159
        %s161 = smul.u32 %s16, 2
        %s162 = sadd.s32 %s161, %s17
        %s163 = smul.u32 16, %s162
      $region24: #{mdbm_intervention.1} parent=19 // pred_fallthru
        _
      // Predicated region
      $region25: #{mdbm_intervention.1} parent=19 // pred_check
        %p164 = pneg %p96
      $region26: #{mdbm_intervention.1} parent=19 // pred_check_branch
        %166 = sbr.rel (%p164) target = $region28
      $region27: #{mdbm_intervention.1} parent=19 // pred_region
        %s167 = smul.u32 %s16, 2
        %s168 = sadd.s32 %s167, %s17
        %p169 = scmp.lt.s32.totalorder %s168, 1
        %s170 = scalar_select %p169, %s168, 1
        %s171 = smul.addr %s170, 2
        %s172 = scalar_lea.vmem %s2, %s171
        %s173 = smul.u32 %s16, 2
        %s174 = sadd.s32 %s173, %s17
      $region28: #{mdbm_intervention.1} parent=19 // pred_fallthru
        _
    $region20: #{mdbm_intervention.1} parent=5 // pred_fallthru
      _
    %p175 = scmp.le.s32.totalorder 1, %s9
    %p176 = scmp.lt.s32.totalorder %s9, 3
    %p177 = pnand %p175, %p176
    %p178 = pneg %p177
    // Predicated region
    $region29: #{mdbm_intervention.1} parent=5 // pred_check
      _
    $region30: #{mdbm_intervention.1} parent=5 // pred_check_branch
      %180 = sbr.rel (%p177) target = $region32
    $region31: #{mdbm_intervention.1} parent=5 // pred_region
      %s181 = ssub.s32 %s9, 1
      %p182 = pneg %p42
      %p183 = pneg %p39
      %s184 = smul.u32 %s18, 2
      %s185 = sadd.s32 %s184, %s19
      %s186 = smul.u32 16, %s185
      %p187 = scmp.lt.s32.totalorder %s186, 31
      %s188 = scalar_select %p187, %s186, 31
      %s189 = smul.addr %s188, 2
      %s190 = smul.addr %s189, 8
      %s191 = scalar_lea.vmem %s1, %s190
      %p192 = pneg %p72
      %p193 = pneg %p69
      %s194 = smul.u32 %s18, 2
      %s195 = sadd.s32 %s194, %s19
      %p196 = scmp.lt.s32.totalorder %s195, 1
      %s197 = scalar_select %p196, %s195, 1
      %s198 = smul.addr %s197, 2
      %s199 = scalar_lea.vmem %s2, %s198
      %p200 = pneg %p102
      %p201 = pneg %p99
      %p202 = pneg %p128
      %p203 = pneg %p125
      %p204 = scmp.lt.s32.totalorder %s18, 0
      %s205 = scalar_select %p204, %s18, 0
      %s206 = smul.addr %s205, 8
      %s207 = scalar_lea.vmem %s3, %s206
      %s208 = smul.u32 %s18, 2
      %s209 = sadd.s32 %s208, %s19
      %s210 = smul.u32 16, %s209
      %p211 = scmp.lt.s32.totalorder %s210, 31
      %s212 = scalar_select %p211, %s210, 31
      %s213 = smul.addr %s212, 2
      %s214 = smul.addr %s213, 8
      %s215 = scalar_lea.vmem %s1, %s214
      %s216 = smul.u32 %s18, 2
      %s217 = sadd.s32 %s216, %s19
      %s218 = smul.u32 16, %s217
      %s219 = smul.u32 %s18, 2
      %s220 = sadd.s32 %s219, %s19
      %p221 = scmp.lt.s32.totalorder %s220, 1
      %s222 = scalar_select %p221, %s220, 1
      %s223 = smul.addr %s222, 2
      %s224 = scalar_lea.vmem %s2, %s223
      %s225 = smul.u32 %s18, 2
      %s226 = sadd.s32 %s225, %s19
      %p227 = scmp.lt.s32.totalorder %s18, 0
      %s228 = scalar_select %p227, %s18, 0
      %s229 = smul.addr %s228, 8
      %s230 = scalar_lea.vmem %s3, %s229
      %p231 = scmp.eq.s32.totalorder %s19, 0
      // Predicated region
      $region33: #{mdbm_intervention.1} parent=31 // pred_check
        %p232 = pneg %p231
      $region34: #{mdbm_intervention.1} parent=31 // pred_check_branch
        %234 = sbr.rel (%p232) target = $region36
      $region35: #{mdbm_intervention.1} parent=31 // pred_region
        %235 = vst [vmem:[#allocation2] sm:$0xff] 0.0
      $region36: #{mdbm_intervention.1} parent=31 // pred_fallthru
        _
      %v236 = vld [vmem:[%s215] sm:$0xff]
      %v237 = vld [vmem:[%s215 + $0x10] sm:$0xff]
      %v238 = vld [vmem:[%s215 + $0x20] sm:$0xff]
      %v239 = vld [vmem:[%s215 + $0x30] sm:$0xff]
      %v240 = vld [vmem:[%s215 + $0x40] sm:$0xff]
      %v241 = vld [vmem:[%s215 + $0x50] sm:$0xff]
      %v242 = vld [vmem:[%s215 + $0x60] sm:$0xff]
      %v243 = vld [vmem:[%s215 + $0x70] sm:$0xff]
      %v244 = vld [vmem:[%s215 + $0x80] sm:$0xff]
      %v245 = vld [vmem:[%s215 + $0x90] sm:$0xff]
      %v246 = vld [vmem:[%s215 + $0xa0] sm:$0xff]
      %v247 = vld [vmem:[%s215 + $0xb0] sm:$0xff]
      %v248 = vld [vmem:[%s215 + $0xc0] sm:$0xff]
      %v249 = vld [vmem:[%s215 + $0xd0] sm:$0xff]
      %v250 = vld [vmem:[%s215 + $0xe0] sm:$0xff]
      %v251 = vld [vmem:[%s215 + $0xf0] sm:$0xff]
      %v252 = vld [vmem:[%s215 + $0x8] sm:$0xff]
      %v253 = vld [vmem:[%s215 + $0x18] sm:$0xff]
      %v254 = vld [vmem:[%s215 + $0x28] sm:$0xff]
      %v255 = vld [vmem:[%s215 + $0x38] sm:$0xff]
      %v256 = vld [vmem:[%s215 + $0x48] sm:$0xff]
      %v257 = vld [vmem:[%s215 + $0x58] sm:$0xff]
      %v258 = vld [vmem:[%s215 + $0x68] sm:$0xff]
      %v259 = vld [vmem:[%s215 + $0x78] sm:$0xff]
      %v260 = vld [vmem:[%s215 + $0x88] sm:$0xff]
      %v261 = vld [vmem:[%s215 + $0x98] sm:$0xff]
      %v262 = vld [vmem:[%s215 + $0xa8] sm:$0xff]
      %v263 = vld [vmem:[%s215 + $0xb8] sm:$0xff]
      %v264 = vld [vmem:[%s215 + $0xc8] sm:$0xff]
      %v265 = vld [vmem:[%s215 + $0xd8] sm:$0xff]
      %v266 = vld [vmem:[%s215 + $0xe8] sm:$0xff]
      %v267 = vld [vmem:[%s215 + $0xf8] sm:$0xff]
      %v268 = vld [vmem:[%s0] sm:$0xff]
      %v269 = vld [vmem:[%s0 + $0x8] sm:$0xff]
      %v270 = vld [vmem:[%s224] sm:$0x1]
      %v271 = vld [vmem:[%s224 + $0x1] sm:$0x1]
      %v272 = vperm.slane %v270, 0
      %273 = vmatpush.xpose.msra.mxu0 %v251
      %274 = vmatpush.xpose.msra.mxu0 %v250
      %275 = vmatpush.xpose.msra.mxu0 %v249
      %276 = vmatpush.xpose.msra.mxu0 %v248
      %277 = vmatpush.xpose.msra.mxu0 %v247
      %278 = vmatpush.xpose.msra.mxu0 %v246
      %279 = vmatpush.xpose.msra.mxu0 %v245
      %280 = vmatpush.xpose.msra.mxu0 %v244
      %281 = vmatpush.xpose.msra.mxu0 %v243
      %282 = vmatpush.xpose.msra.mxu0 %v242
      %283 = vmatpush.xpose.msra.mxu0 %v241
      %284 = vmatpush.xpose.msra.mxu0 %v240
      %285 = vmatpush.xpose.msra.mxu0 %v239
      %286 = vmatpush.xpose.msra.mxu0 %v238
      %287 = vmatpush.xpose.msra.mxu0 %v237
      %288 = vmatpush.xpose.msra.mxu0 %v236
      %289 = vmatmul.f32.gmra.mxu0 %v268
      %v290 = vpop.f32.mrf.mxu0
      %v291 = vadd.f32 %v272, %v290
      %292 = vmatmul.f32.gmra.mxu0 %v269
      %v293 = vpop.f32.mrf.mxu0
      %v294 = vadd.f32 %v272, %v293
      %295 = vdwg.mxu0
      %v296 = vmax.f32 %v291, 0.0
      %v297 = vmax.f32 %v294, 0.0
      %v298 = vsub.f32 %v296, %v297
      %v299 = vperm.slane %v271, 0
      %v300 = vmul.f32 %v299, %v298
      %v301 = vadd.f32 %v297, %v300
      %v302 = vld [vmem:[#allocation2] sm:$0xff]
      %303 = vmatpush.msra.mxu0 %v267
      %304 = vmatpush.msra.mxu0 %v266
      %305 = vmatpush.msra.mxu0 %v265
      %306 = vmatpush.msra.mxu0 %v264
      %307 = vmatpush.msra.mxu0 %v263
      %308 = vmatpush.msra.mxu0 %v262
      %309 = vmatpush.msra.mxu0 %v261
      %310 = vmatpush.msra.mxu0 %v260
      %311 = vmatpush.msra.mxu0 %v259
      %312 = vmatpush.msra.mxu0 %v258
      %313 = vmatpush.msra.mxu0 %v257
      %314 = vmatpush.msra.mxu0 %v256
      %315 = vmatpush.msra.mxu0 %v255
      %316 = vmatpush.msra.mxu0 %v254
      %317 = vmatpush.msra.mxu0 %v253
      %318 = vmatpush.msra.mxu0 %v252
      %319 = vmatmul.f32.gmra.mxu0 %v301
      %v320 = vpop.f32.mrf.mxu0
      %v321 = vadd.f32 0.0, %v320
      %322 = vdwg.mxu0
      %v323 = vadd.f32 %v302, %v321
      %324 = vst [vmem:[#allocation2] sm:$0xff] %v323
      %p325 = scmp.eq.s32.totalorder %s19, 1
      // Predicated region
      $region37: #{mdbm_intervention.1} parent=31 // pred_check
        %p326 = pneg %p325
      $region38: #{mdbm_intervention.1} parent=31 // pred_check_branch
        %328 = sbr.rel (%p326) target = $region40
      $region39: #{mdbm_intervention.1} parent=31 // pred_region
        %v329 = vld [vmem:[#allocation2] sm:$0xff]
        %330 = vst [vmem:[%s230] sm:$0xff] %v329
      $region40: #{mdbm_intervention.1} parent=31 // pred_fallthru
        _
      %p331 = scmp.lt.s32.totalorder %s18, 0
      %s332 = scalar_select %p331, %s18, 0
      %s333 = smul.addr %s332, 8
      %s334 = scalar_lea.vmem %s3, %s333
      // Predicated region
      $region41: #{mdbm_intervention.1} parent=31 // pred_check
        %p335 = pneg %p125
      $region42: #{mdbm_intervention.1} parent=31 // pred_check_branch
        %337 = sbr.rel (%p335) target = $region44
      $region43: #{mdbm_intervention.1} parent=31 // pred_region
        _
      $region44: #{mdbm_intervention.1} parent=31 // pred_fallthru
        _
      // Predicated region
      $region45: #{mdbm_intervention.1} parent=31 // pred_check
        %p338 = pneg %p125
      $region46: #{mdbm_intervention.1} parent=31 // pred_check_branch
        %340 = sbr.rel (%p338) target = $region48
      $region47: #{mdbm_intervention.1} parent=31 // pred_region
        %p341 = scmp.lt.s32.totalorder %s18, 0
        %s342 = scalar_select %p341, %s18, 0
        %s343 = smul.addr %s342, 8
        %s344 = scalar_lea.vmem %s3, %s343
      $region48: #{mdbm_intervention.1} parent=31 // pred_fallthru
        _
    $region32: #{mdbm_intervention.1} parent=5 // pred_fallthru
      _
    %p345 = scmp.le.s32.totalorder 2, %s9
    // Predicated region
    $region49: #{mdbm_intervention.1} parent=5 // pred_check
      %p346 = pneg %p345
    $region50: #{mdbm_intervention.1} parent=5 // pred_check_branch
      %348 = sbr.rel (%p346) target = $region52
    $region51: #{mdbm_intervention.1} parent=5 // pred_region
      %s349 = ssub.s32 %s9, 2
    $region52: #{mdbm_intervention.1} parent=5 // pred_fallthru
      _
  $region6: #{mdbm_intervention.1} parent=0 // loop_footer
    %s13 = sadd.s32 1, %s9
  $region7: #{mdbm_intervention.1} parent=0 // loop_footer_branch
    %8 = sbr.rel target = $region3
  $region8: #{mdbm_intervention.1} parent=0 // loop_exit
    _

</llo_original>
